<compile_context>
chip_gen: v5e
topology: v5e:2x2
jax: 0.10.0
libtpu: 0.0.40
codegen_flags: <defaults>
</compile_context>

<pallas_src>
import functools
import math

import jax
import jax.numpy as jnp
from jax.experimental import pallas as pl
from jax.experimental.pallas import tpu as pltpu

EPS = 1e-5                       # nn.BatchNorm1d default eps
_VMEM_LIMIT = 32 * 1024 * 1024   # safe scoped-VMEM limit on v5e/v6e/v7x
_LANE_TARGET = 1024              # aim for ~1024-lane tiles
_SINGLE_BLOCK_MAX_LANES = 4096   # small problems: one tile for everything


def _conv_tile(x_ref, w0_ref, w1_ref, w2_ref, L):
    """Circular k=3 conv on one flat (Cin, B_blk*L) tile -> (Cout, B_blk*L) f32.

    The tile holds B_blk whole batch elements laid out back-to-back along the
    lane axis; the circular shift of each length-L window is a lane roll plus
    an iota-mask fix-up at the window boundaries.
    """
    x = x_ref[...]                                   # (Cin, BL), native dtype
    BL = x.shape[-1]
    lane = jax.lax.broadcasted_iota(jnp.int32, x.shape, 1) % L
    # x[:, l-1] within each window (wrap l==0 -> l+L-1)
    xm1 = jnp.where(lane == 0,
                    pltpu.roll(x, BL - L + 1, axis=1),
                    pltpu.roll(x, 1, axis=1))
    # x[:, l+1] within each window (wrap l==L-1 -> l-(L-1))
    xp1 = jnp.where(lane == L - 1,
                    pltpu.roll(x, L - 1, axis=1),
                    pltpu.roll(x, BL - 1, axis=1))
    y = jnp.dot(w0_ref[...], xm1, preferred_element_type=jnp.float32)
    y += jnp.dot(w1_ref[...], x, preferred_element_type=jnp.float32)
    y += jnp.dot(w2_ref[...], xp1, preferred_element_type=jnp.float32)
    return y                                         # (Cout, BL) f32


def _stats_kernel(x_ref, w0_ref, w1_ref, w2_ref, sum_ref, ssq_ref, *, L):
    # Per-shard accumulators stay VMEM-resident across the inner ("arbitrary")
    # reduction axis; each shard (leading "parallel" axis) owns its own block.
    @pl.when(pl.program_id(1) == 0)
    def _init():
        sum_ref[...] = jnp.zeros_like(sum_ref)
        ssq_ref[...] = jnp.zeros_like(ssq_ref)

    y = _conv_tile(x_ref, w0_ref, w1_ref, w2_ref, L)          # (Cout, BL) f32
    sum_ref[...] += jnp.sum(y, axis=-1, keepdims=True)         # (Cout, 1)
    ssq_ref[...] += jnp.sum(y * y, axis=-1, keepdims=True)     # (Cout, 1)


def _apply_kernel(x_ref, w0_ref, w1_ref, w2_ref, scale_ref, shift_ref, o_ref,
                  *, L):
    y = _conv_tile(x_ref, w0_ref, w1_ref, w2_ref, L)           # (Cout, BL) f32
    out = jnp.maximum(y * scale_ref[...] + shift_ref[...], 0.0)
    o_ref[...] = out.astype(o_ref.dtype)


def convrelu_forward(x_ncl, weight, bias, gamma, beta):
    """x_ncl: (N, Cin, L) as in PyTorch Conv1d. Returns (N, Cout, L).

    `bias` is accepted for API parity but never enters the kernels: a
    per-channel constant added before train-mode BatchNorm is cancelled
    exactly by the mean subtraction.
    """
    del bias  # mathematically cancelled by BN mean subtraction
    N, Cin, L = x_ncl.shape
    Cout = weight.shape[0]

    # PyTorch conv weight (Cout, Cin, 3) -> three (Cout, Cin) tap matrices,
    # kept in their native dtype (bf16 stays bf16 -> fast MXU path).
    w0, w1, w2 = weight[:, :, 0], weight[:, :, 1], weight[:, :, 2]

    # ---- choose a lane-dense batch block ------------------------------------
    if N * L <= _SINGLE_BLOCK_MAX_LANES:
        B_blk, Np = N, N                       # whole problem in one tile
    else:
        m = 128 // math.gcd(L, 128)            # smallest B_blk with BL % 128 == 0
        B_blk = max(m, ((_LANE_TARGET // L) // m) * m)
        Np = ((N + B_blk - 1) // B_blk) * B_blk
    NB = Np // B_blk
    BL = B_blk * L

    # ---- layout: (N, Cin, L) -> (Cin, Np*L), zero-pad extra batch elements --
    # Padded samples produce an exactly-zero conv output (bias folded away),
    # so they contribute nothing to the stats; counts use the true N*L.
    x_t = jnp.transpose(x_ncl, (1, 0, 2))      # (Cin, N, L)
    if Np != N:
        x_t = jnp.pad(x_t, ((0, 0), (0, Np - N), (0, 0)))
    x2 = x_t.reshape(Cin, Np * L)

    w_spec2 = pl.BlockSpec((Cout, Cin), lambda s, n: (0, 0))
    vec_spec = pl.BlockSpec((Cout, 1), lambda n: (0, 0))

    # ---- pass 1: per-channel sum / sum-of-squares of the conv output --------
    # Leading "parallel" shard axis lets v7x's two TensorCores split the
    # reduction; inner axis stays "arbitrary" (sequential accumulator).
    S = 2 if (NB >= 2 and NB % 2 == 0) else 1
    NBs = NB // S
    x_spec_s = pl.BlockSpec((Cin, BL), lambda s, n: (0, s * NBs + n))
    part_spec = pl.BlockSpec((None, Cout, 1), lambda s, n: (s, 0, 0))

    csum_p, cssq_p = pl.pallas_call(
        functools.partial(_stats_kernel, L=L),
        out_shape=(jax.ShapeDtypeStruct((S, Cout, 1), jnp.float32),
                   jax.ShapeDtypeStruct((S, Cout, 1), jnp.float32)),
        grid=(S, NBs),
        in_specs=[x_spec_s, w_spec2, w_spec2, w_spec2],
        out_specs=(part_spec, part_spec),
        compiler_params=pltpu.CompilerParams(
            dimension_semantics=("parallel", "arbitrary"),
            vmem_limit_bytes=_VMEM_LIMIT),
    )(x2, w0, w1, w2)
    csum = jnp.sum(csum_p, axis=0)             # (Cout, 1)
    cssq = jnp.sum(cssq_p, axis=0)             # (Cout, 1)

    # ---- finalize BN stats (tiny per-channel math, plain JAX) ----------------
    # TODO(synk): one-pass E[y^2]-E[y]^2 can cancel badly if |mean| >> std; a
    # shifted / Welford accumulation would be more robust for such inputs.
    cnt = jnp.float32(N * L)
    mean = csum[:, 0] / cnt
    var = jnp.maximum(cssq[:, 0] / cnt - mean * mean, 0.0)   # biased (train mode)
    scale = gamma.astype(jnp.float32) * jax.lax.rsqrt(var + EPS)
    shift = beta.astype(jnp.float32) - mean * scale
    scale2 = scale.reshape(Cout, 1)
    shift2 = shift.reshape(Cout, 1)

    # ---- pass 2: recompute the cheap conv, apply folded BN + ReLU ------------
    x_spec = pl.BlockSpec((Cin, BL), lambda n: (0, n))
    w_spec = pl.BlockSpec((Cout, Cin), lambda n: (0, 0))
    out2 = pl.pallas_call(
        functools.partial(_apply_kernel, L=L),
        out_shape=jax.ShapeDtypeStruct((Cout, Np * L), x_ncl.dtype),
        grid=(NB,),
        in_specs=[x_spec, w_spec, w_spec, w_spec, vec_spec, vec_spec],
        out_specs=pl.BlockSpec((Cout, BL), lambda n: (0, n)),
        compiler_params=pltpu.CompilerParams(
            dimension_semantics=("parallel",),
            vmem_limit_bytes=_VMEM_LIMIT),
    )(x2, w0, w1, w2, scale2, shift2)

    out = out2.reshape(Cout, Np, L)[:, :N, :]
    return jnp.transpose(out, (1, 0, 2))       # (N, Cout, L)


def _reference(x_ncl, weight, bias, gamma, beta):
    """Pure-JAX reference with identical semantics (sanity check)."""
    xm1 = jnp.roll(x_ncl, 1, axis=2)   # x[l-1]
    xp1 = jnp.roll(x_ncl, -1, axis=2)  # x[l+1]
    y = (jnp.einsum("oc,ncl->nol", weight[:, :, 0], xm1)
         + jnp.einsum("oc,ncl->nol", weight[:, :, 1], x_ncl)
         + jnp.einsum("oc,ncl->nol", weight[:, :, 2], xp1)
         + bias[None, :, None])
    mean = jnp.mean(y, axis=(0, 2), keepdims=True)
    var = jnp.mean((y - mean) ** 2, axis=(0, 2), keepdims=True)
    yhat = (y - mean) * jax.lax.rsqrt(var + EPS)
    out = gamma[None, :, None] * yhat + beta[None, :, None]
    return jnp.maximum(out, 0.0)


if __name__ == "__main__":
    # small shapes consistent with the module: nin=4 -> nout=8, batch=2, L=16
    N, Cin, Cout, L = 2, 4, 8, 16

    key = jax.random.PRNGKey(0)
    kx, kw, kb, kg, kbe = jax.random.split(key, 5)

    x = jax.random.normal(kx, (N, Cin, L), dtype=jnp.float32)
    weight = jax.random.normal(kw, (Cout, Cin, 3), dtype=jnp.float32) * 0.1
    bias = jax.random.normal(kb, (Cout,), dtype=jnp.float32) * 0.1
    gamma = 1.0 + 0.1 * jax.random.normal(kg, (Cout,), dtype=jnp.float32)
    beta = 0.1 * jax.random.normal(kbe, (Cout,), dtype=jnp.float32)
    # TODO(synk): BatchNorm running-stats update (module training side effect)
    # is not reproduced; only the forward output (training-mode batch stats) is.

    out = jax.block_until_ready(convrelu_forward(x, weight, bias, gamma, beta))

    ref = _reference(x, weight, bias, gamma, beta)
    assert out.shape == (N, Cout, L)
    assert jnp.allclose(out, ref, rtol=1e-4, atol=1e-4), "mismatch vs reference"

    print("KERNEL_OK")
</pallas_src>

<mosaic_0001>
module attributes {stable_mosaic.version = 11 : i64} {
  func.func @_stats_kernel(%arg0: i32, %arg1: i32, %arg2: memref<4x32xf32, #tpu.memory_space<vmem>>, %arg3: memref<8x4xf32, #tpu.memory_space<vmem>>, %arg4: memref<8x4xf32, #tpu.memory_space<vmem>>, %arg5: memref<8x4xf32, #tpu.memory_space<vmem>>, %arg6: memref<1x8x1xf32, #tpu.memory_space<vmem>>, %arg7: memref<1x8x1xf32, #tpu.memory_space<vmem>>) attributes {dimension_semantics = [#tpu.dimension_semantics<parallel>, #tpu.dimension_semantics<arbitrary>], iteration_bounds = array<i64: 1, 1>, scalar_prefetch = 0 : i64, scratch_operands = 0 : i64, tpu.core_type = #tpu.core_type<tc>, window_params = [{transform_indices = @transform_0, window_bounds = array<i64: 4, 32>}, {pipeline_mode = #tpu.pipeline_mode<synchronous>, transform_indices = @transform_1, window_bounds = array<i64: 8, 4>}, {pipeline_mode = #tpu.pipeline_mode<synchronous>, transform_indices = @transform_2, window_bounds = array<i64: 8, 4>}, {pipeline_mode = #tpu.pipeline_mode<synchronous>, transform_indices = @transform_3, window_bounds = array<i64: 8, 4>}, {transform_indices = @transform_4, window_bounds = array<i64: 1, 8, 1>}, {transform_indices = @transform_5, window_bounds = array<i64: 1, 8, 1>}]} {
    %c0_i32 = arith.constant 0 : i32
    %0 = arith.cmpi eq, %arg1, %c0_i32 : i32
    %1 = arith.extui %0 : i1 to i32
    %c0_i32_0 = arith.constant 0 : i32
    %2 = arith.cmpi ne, %1, %c0_i32_0 : i32
    scf.if %2 {
      %cst_31 = arith.constant 0.000000e+00 : f32
      %56 = vector.broadcast %cst_31 : f32 to vector<8x1xf32>
      %c0_32 = arith.constant 0 : index
      %c0_33 = arith.constant 0 : index
      %c0_34 = arith.constant 0 : index
      %57 = vector.load %arg6[%c0_32, %c0_33, %c0_34] : memref<1x8x1xf32, #tpu.memory_space<vmem>>, vector<1x8x1xf32>
      %58 = vector.shape_cast %57 : vector<1x8x1xf32> to vector<8x1xf32>
      %59 = vector.shape_cast %56 : vector<8x1xf32> to vector<1x8x1xf32>
      tpu.vector_store %arg6[%c0_32, %c0_33, %c0_34], %59 {strides = array<i32>} : memref<1x8x1xf32, #tpu.memory_space<vmem>>, vector<1x8x1xf32>,
      %cst_35 = arith.constant 0.000000e+00 : f32
      %60 = vector.broadcast %cst_35 : f32 to vector<8x1xf32>
      %c0_36 = arith.constant 0 : index
      %c0_37 = arith.constant 0 : index
      %c0_38 = arith.constant 0 : index
      %61 = vector.load %arg7[%c0_36, %c0_37, %c0_38] : memref<1x8x1xf32, #tpu.memory_space<vmem>>, vector<1x8x1xf32>
      %62 = vector.shape_cast %61 : vector<1x8x1xf32> to vector<8x1xf32>
      %63 = vector.shape_cast %60 : vector<8x1xf32> to vector<1x8x1xf32>
      tpu.vector_store %arg7[%c0_36, %c0_37, %c0_38], %63 {strides = array<i32>} : memref<1x8x1xf32, #tpu.memory_space<vmem>>, vector<1x8x1xf32>,
    } else {
    }
    %c0 = arith.constant 0 : index
    %c0_1 = arith.constant 0 : index
    %3 = vector.load %arg2[%c0, %c0_1] : memref<4x32xf32, #tpu.memory_space<vmem>>, vector<4x32xf32>
    %4 = tpu.iota {dimensions = array<i32: 1>} : vector<4x32xi32>
    %c16_i32 = arith.constant 16 : i32
    %c0_i32_2 = arith.constant 0 : i32
    %5 = arith.cmpi eq, %c16_i32, %c0_i32_2 : i32
    %c1_i32 = arith.constant 1 : i32
    %6 = arith.select %5, %c1_i32, %c16_i32 : i32
    %7 = vector.broadcast %6 : i32 to vector<4x32xi32>
    %8 = arith.remsi %4, %7 : vector<4x32xi32>
    %c0_i32_3 = arith.constant 0 : i32
    %9 = vector.broadcast %c0_i32_3 : i32 to vector<4x32xi32>
    %10 = arith.cmpi ne, %8, %9 : vector<4x32xi32>
    %c0_i32_4 = arith.constant 0 : i32
    %11 = vector.broadcast %c0_i32_4 : i32 to vector<4x32xi32>
    %12 = arith.cmpi slt, %8, %11 : vector<4x32xi32>
    %c0_i32_5 = arith.constant 0 : i32
    %13 = arith.cmpi slt, %6, %c0_i32_5 : i32
    %14 = vector.broadcast %13 : i1 to vector<4x32xi1>
    %15 = vector.broadcast %14 : vector<4x32xi1> to vector<4x32xi1>
    %16 = arith.xori %12, %15 : vector<4x32xi1>
    %17 = arith.andi %16, %10 : vector<4x32xi1>
    %18 = vector.broadcast %6 : i32 to vector<4x32xi32>
    %19 = arith.addi %8, %18 : vector<4x32xi32>
    %20 = arith.select %17, %19, %8 : vector<4x32xi1>, vector<4x32xi32>
    %c0_i32_6 = arith.constant 0 : i32
    %21 = vector.broadcast %c0_i32_6 : i32 to vector<4x32xi32>
    %22 = arith.cmpi eq, %20, %21 : vector<4x32xi32>
    %c17_i32 = arith.constant 17 : i32
    %23 = tpu.dynamic_rotate %3 by %c17_i32 dim 1 : vector<4x32xf32>, i32 -> vector<4x32xf32>
    %c1_i32_7 = arith.constant 1 : i32
    %24 = tpu.dynamic_rotate %3 by %c1_i32_7 dim 1 : vector<4x32xf32>, i32 -> vector<4x32xf32>
    %25 = arith.select %22, %23, %24 : vector<4x32xi1>, vector<4x32xf32>
    %c15_i32 = arith.constant 15 : i32
    %26 = vector.broadcast %c15_i32 : i32 to vector<4x32xi32>
    %27 = arith.cmpi eq, %20, %26 : vector<4x32xi32>
    %c15_i32_8 = arith.constant 15 : i32
    %28 = tpu.dynamic_rotate %3 by %c15_i32_8 dim 1 : vector<4x32xf32>, i32 -> vector<4x32xf32>
    %c31_i32 = arith.constant 31 : i32
    %29 = tpu.dynamic_rotate %3 by %c31_i32 dim 1 : vector<4x32xf32>, i32 -> vector<4x32xf32>
    %30 = arith.select %27, %28, %29 : vector<4x32xi1>, vector<4x32xf32>
    %c0_9 = arith.constant 0 : index
    %c0_10 = arith.constant 0 : index
    %31 = vector.load %arg3[%c0_9, %c0_10] : memref<8x4xf32, #tpu.memory_space<vmem>>, vector<8x4xf32>
    %cst = arith.constant dense<0.000000e+00> : vector<8x32xf32>
    %32 = tpu.matmul %31, %25, %cst {dimension_numbers = #tpu.dot_dimension_numbers<[1], [0], [0], [1], [0, 0, 1, 1], [], []>} : vector<8x4xf32>, vector<4x32xf32>, vector<8x32xf32> -> vector<8x32xf32>
    %c0_11 = arith.constant 0 : index
    %c0_12 = arith.constant 0 : index
    %33 = vector.load %arg4[%c0_11, %c0_12] : memref<8x4xf32, #tpu.memory_space<vmem>>, vector<8x4xf32>
    %cst_13 = arith.constant dense<0.000000e+00> : vector<8x32xf32>
    %34 = tpu.matmul %33, %3, %cst_13 {dimension_numbers = #tpu.dot_dimension_numbers<[1], [0], [0], [1], [0, 0, 1, 1], [], []>} : vector<8x4xf32>, vector<4x32xf32>, vector<8x32xf32> -> vector<8x32xf32>
    %35 = arith.addf %32, %34 : vector<8x32xf32>
    %c0_14 = arith.constant 0 : index
    %c0_15 = arith.constant 0 : index
    %36 = vector.load %arg5[%c0_14, %c0_15] : memref<8x4xf32, #tpu.memory_space<vmem>>, vector<8x4xf32>
    %cst_16 = arith.constant dense<0.000000e+00> : vector<8x32xf32>
    %37 = tpu.matmul %36, %30, %cst_16 {dimension_numbers = #tpu.dot_dimension_numbers<[1], [0], [0], [1], [0, 0, 1, 1], [], []>} : vector<8x4xf32>, vector<4x32xf32>, vector<8x32xf32> -> vector<8x32xf32>
    %38 = arith.addf %35, %37 : vector<8x32xf32>
    %c0_17 = arith.constant 0 : index
    %c0_18 = arith.constant 0 : index
    %c0_19 = arith.constant 0 : index
    %39 = vector.load %arg6[%c0_17, %c0_18, %c0_19] : memref<1x8x1xf32, #tpu.memory_space<vmem>>, vector<1x8x1xf32>
    %40 = vector.shape_cast %39 : vector<1x8x1xf32> to vector<8x1xf32>
    %cst_20 = arith.constant dense<0.000000e+00> : vector<8xf32>
    %41 = vector.multi_reduction <add>, %38, %cst_20 [1] : vector<8x32xf32> to vector<8xf32>
    %42 = vector.shape_cast %41 : vector<8xf32> to vector<8x1xf32>
    %43 = arith.addf %40, %42 : vector<8x1xf32>
    %c0_21 = arith.constant 0 : index
    %c0_22 = arith.constant 0 : index
    %c0_23 = arith.constant 0 : index
    %44 = vector.load %arg6[%c0_21, %c0_22, %c0_23] : memref<1x8x1xf32, #tpu.memory_space<vmem>>, vector<1x8x1xf32>
    %45 = vector.shape_cast %44 : vector<1x8x1xf32> to vector<8x1xf32>
    %46 = vector.shape_cast %43 : vector<8x1xf32> to vector<1x8x1xf32>
    tpu.vector_store %arg6[%c0_21, %c0_22, %c0_23], %46 {strides = array<i32>} : memref<1x8x1xf32, #tpu.memory_space<vmem>>, vector<1x8x1xf32>,
    %c0_24 = arith.constant 0 : index
    %c0_25 = arith.constant 0 : index
    %c0_26 = arith.constant 0 : index
    %47 = vector.load %arg7[%c0_24, %c0_25, %c0_26] : memref<1x8x1xf32, #tpu.memory_space<vmem>>, vector<1x8x1xf32>
    %48 = vector.shape_cast %47 : vector<1x8x1xf32> to vector<8x1xf32>
    %49 = arith.mulf %38, %38 : vector<8x32xf32>
    %cst_27 = arith.constant dense<0.000000e+00> : vector<8xf32>
    %50 = vector.multi_reduction <add>, %49, %cst_27 [1] : vector<8x32xf32> to vector<8xf32>
    %51 = vector.shape_cast %50 : vector<8xf32> to vector<8x1xf32>
    %52 = arith.addf %48, %51 : vector<8x1xf32>
    %c0_28 = arith.constant 0 : index
    %c0_29 = arith.constant 0 : index
    %c0_30 = arith.constant 0 : index
    %53 = vector.load %arg7[%c0_28, %c0_29, %c0_30] : memref<1x8x1xf32, #tpu.memory_space<vmem>>, vector<1x8x1xf32>
    %54 = vector.shape_cast %53 : vector<1x8x1xf32> to vector<8x1xf32>
    %55 = vector.shape_cast %52 : vector<8x1xf32> to vector<1x8x1xf32>
    tpu.vector_store %arg7[%c0_28, %c0_29, %c0_30], %55 {strides = array<i32>} : memref<1x8x1xf32, #tpu.memory_space<vmem>>, vector<1x8x1xf32>,
    return
  }
  func.func @transform_0(%arg0: i32, %arg1: i32) -> (i32, i32) {
    %c1_i32 = arith.constant 1 : i32
    %0 = arith.muli %arg0, %c1_i32 : i32
    %1 = arith.addi %0, %arg1 : i32
    %c0_i32 = arith.constant 0 : i32
    %c0_i32_0 = arith.constant 0 : i32
    return %c0_i32, %1 : i32, i32
  }
  func.func @transform_1(%arg0: i32, %arg1: i32) -> (i32, i32) {
    %c0_i32 = arith.constant 0 : i32
    %c0_i32_0 = arith.constant 0 : i32
    %c0_i32_1 = arith.constant 0 : i32
    return %c0_i32, %c0_i32_0 : i32, i32
  }
  func.func @transform_2(%arg0: i32, %arg1: i32) -> (i32, i32) {
    %c0_i32 = arith.constant 0 : i32
    %c0_i32_0 = arith.constant 0 : i32
    %c0_i32_1 = arith.constant 0 : i32
    return %c0_i32, %c0_i32_0 : i32, i32
  }
  func.func @transform_3(%arg0: i32, %arg1: i32) -> (i32, i32) {
    %c0_i32 = arith.constant 0 : i32
    %c0_i32_0 = arith.constant 0 : i32
    %c0_i32_1 = arith.constant 0 : i32
    return %c0_i32, %c0_i32_0 : i32, i32
  }
  func.func @transform_4(%arg0: i32, %arg1: i32) -> (i32, i32, i32) {
    %c0_i32 = arith.constant 0 : i32
    %c0_i32_0 = arith.constant 0 : i32
    %c0_i32_1 = arith.constant 0 : i32
    return %arg0, %c0_i32, %c0_i32_0 : i32, i32, i32
  }
  func.func @transform_5(%arg0: i32, %arg1: i32) -> (i32, i32, i32) {
    %c0_i32 = arith.constant 0 : i32
    %c0_i32_0 = arith.constant 0 : i32
    %c0_i32_1 = arith.constant 0 : i32
    return %arg0, %c0_i32, %c0_i32_0 : i32, i32, i32
  }
}

</mosaic_0001>

<llo_original>
// kernel: tpu_custom_call.1
$region0: #{tpu_custom_call.1}
  #allocation0 [shape = 'u32[]', space=smem, size = 0x4, offset = 0x4, fixed_abs, tag = 'smem constant byte address 0x4 - core index']
  #allocation1 [shape = 'u32[72,128]{1,0:T(1,128)}', space=vmem, size = 0x9000, scoped, tag = 'internal scratch']
  %s0 = inlined_call_operand.vmem [shape: f32[4,32], index: 0, kind: input, shape index: {}]
  %s1 = inlined_call_operand.vmem [shape: f32[8,4], index: 1, kind: input, shape index: {}]
  %s2 = inlined_call_operand.vmem [shape: f32[8,4], index: 2, kind: input, shape index: {}]
  %s3 = inlined_call_operand.vmem [shape: f32[8,4], index: 3, kind: input, shape index: {}]
  %s4 = inlined_call_operand.vmem [shape: f32[1,8,1], index: 4, kind: output, shape index: {0}]
  %s5 = inlined_call_operand.vmem [shape: f32[1,8,1], index: 5, kind: output, shape index: {1}]
  %6 = xla_tuple %s4, %s5
  %s7 = sld [smem:[#allocation0]]
  $region38: #{tpu_custom_call.1} parent=0
    _
  %s9 = ssub.s32 1, %s7
  %s10 = scalar_select 0, %s9, %s7
  // Predicated region
  $region2: #{tpu_custom_call.1} parent=0 // pred_check
    _
  $region3: #{tpu_custom_call.1} parent=0 // pred_check_branch
    %12 = sbr.rel (0) target = $region5
  $region4: #{tpu_custom_call.1} parent=0 // pred_region
    %s13 = sadd.s32 0, 0
    %p14 = scmp.lt.s32.totalorder %s13, 0
    %s15 = scalar_select %p14, %s13, 0
    %s16 = smul.addr %s15, 4
    %s17 = scalar_lea.vmem %s0, %s16
    %s18 = sadd.s32 0, 0
  $region5: #{tpu_custom_call.1} parent=0 // pred_fallthru
    _
  // Predicated region
  $region6: #{tpu_custom_call.1} parent=0 // pred_check
    _
  $region7: #{tpu_custom_call.1} parent=0 // pred_check_branch
    %20 = sbr.rel (0) target = $region9
  $region8: #{tpu_custom_call.1} parent=0 // pred_region
    _
  $region9: #{tpu_custom_call.1} parent=0 // pred_fallthru
    _
  // Predicated region
  $region10: #{tpu_custom_call.1} parent=0 // pred_check
    _
  $region11: #{tpu_custom_call.1} parent=0 // pred_check_branch
    %22 = sbr.rel (0) target = $region13
  $region12: #{tpu_custom_call.1} parent=0 // pred_region
    _
  $region13: #{tpu_custom_call.1} parent=0 // pred_fallthru
    _
  // Predicated region
  $region14: #{tpu_custom_call.1} parent=0 // pred_check
    _
  $region15: #{tpu_custom_call.1} parent=0 // pred_check_branch
    %24 = sbr.rel (0) target = $region17
  $region16: #{tpu_custom_call.1} parent=0 // pred_region
    _
  $region17: #{tpu_custom_call.1} parent=0 // pred_fallthru
    _
  %s25 = sadd.s32 0, 0
  %p26 = scmp.lt.s32.totalorder %s25, 0
  %s27 = scalar_select %p26, %s25, 0
  %s28 = smul.addr %s27, 4
  %s29 = scalar_lea.vmem %s0, %s28
  %s30 = sadd.s32 0, 0
  %p31 = scmp.lt.s32.totalorder %s30, 0
  %s32 = scalar_select %p31, %s30, 0
  %s33 = smul.addr %s32, 4
  %s34 = scalar_lea.vmem %s0, %s33
  %s35 = sadd.s32 0, 0
  %p36 = scmp.eq.s32.totalorder 0, 0
  // Predicated region
  $region18: #{tpu_custom_call.1} parent=0 // pred_check
    %p37 = pneg %p36
  $region19: #{tpu_custom_call.1} parent=0 // pred_check_branch
    %39 = sbr.rel (%p37) target = $region21
  $region20: #{tpu_custom_call.1} parent=0 // pred_region
    %vm40 = vcmask 7168
    %41 = vst.msk [vmem:[%s4] sm:$0xff] %vm40, 0.0
    %42 = vst.msk [vmem:[%s5] sm:$0xff] %vm40, 0.0
  $region21: #{tpu_custom_call.1} parent=0 // pred_fallthru
    _
  %v43 = vld [vmem:[%s34] sm:$0xf]
  %v44 = vlaneseq
  %v45 = vand.u32 %v44, 127
  %vm46 = vcmp.lt.s32.totalorder %v45, 0
  %v47 = vsub.s32 0, %v45
  %v48 = vsel %vm46, %v47, %v45
  %v49 = vshrl.u32 %v48, 4
  %v50 = vand.u32 %v48, 15
  %v51 = vsub.s32 0, %v50
  %v52 = vsel %vm46, %v51, %v50
  %vm53 = vcmp.ne.s32.totalorder %v52, 0
  %vm54 = vcmp.lt.s32.totalorder %v52, 0
  %vm55 = vmand %vm54, %vm53
  %v56 = vadd.s32 %v52, 16
  %v57 = vsel %vm55, %v56, %v52
  %vm58 = vcmp.eq.s32.totalorder %v57, 0
  %vm59 = vcmask 1047808
  %60 = vrot.lane.b32.xlu0 %v43, 32
  %v61 = vpop.permute.xlu0 %60
  %v62 = vsel %vm59, %v61, %v43
  %63 = vrot.lane.b32.xlu0 %v62, 32
  %v64 = vpop.permute.xlu0 %63
  %v65 = vsel %vm59, %v64, %v43
  %67 = vrot.lane.b32.xlu0 %v65, 113
  %v68 = vpop.permute.xlu0 %67
  %70 = vrot.lane.b32.xlu0 %v65, 97
  %v71 = vpop.permute.xlu0 %70
  %v73 = vsel %vm58, %v68, %v71
  %vm74 = vcmp.eq.s32.totalorder %v57, 15
  %75 = vrot.lane.b32.xlu0 %v65, 111
  %v76 = vpop.permute.xlu0 %75
  %78 = vrot.lane.b32.xlu0 %v65, 127
  %v79 = vpop.permute.xlu0 %78
  %v81 = vsel %vm74, %v76, %v79
  %v82 = vld [vmem:[%s1] sm:$0xff]
  %v83 = vld [vmem:[%s2] sm:$0xff]
  %vm84 = vcmask 31744
  %v86 = vsel %vm84, %v83, 0
  %vm88 = vcmask 1043456
  %v90 = vsel %vm88, %v43, 0
  %92 = vmatpush.msra.mxu0 0.0
  %93 = vmatpush.msra.mxu0 0.0
  %94 = vmatpush.msra.mxu0 0.0
  %95 = vmatpush.msra.mxu0 0.0
  %96 = vmatpush.msra.mxu0 0.0
  %97 = vmatpush.msra.mxu0 0.0
  %98 = vmatpush.msra.mxu0 0.0
  %99 = vmatpush.msra.mxu0 0.0
  %100 = vmatpush.msra.mxu0 0.0
  %101 = vmatpush.msra.mxu0 0.0
  %102 = vmatpush.msra.mxu0 0.0
  %103 = vmatpush.msra.mxu0 0.0
  %104 = vmatpush.msra.mxu0 0.0
  %105 = vmatpush.msra.mxu0 0.0
  %106 = vmatpush.msra.mxu0 0.0
  %107 = vmatpush.msra.mxu0 %v90
  %108 = vmatmul.f32.gmra.mxu0 %v86
  %v109 = vpop.f32.mrf.mxu0
  %v110 = vadd.f32 0.0, %v109
  %111 = vdwg.mxu0
  %v113 = vsel %vm84, %v82, 0
  %v116 = vsel %vm88, %v73, 0
  %118 = vmatpush.msra.mxu0 0.0
  %119 = vmatpush.msra.mxu0 0.0
  %120 = vmatpush.msra.mxu0 0.0
  %121 = vmatpush.msra.mxu0 0.0
  %122 = vmatpush.msra.mxu0 0.0
  %123 = vmatpush.msra.mxu0 0.0
  %124 = vmatpush.msra.mxu0 0.0
  %125 = vmatpush.msra.mxu0 0.0
  %126 = vmatpush.msra.mxu0 0.0
  %127 = vmatpush.msra.mxu0 0.0
  %128 = vmatpush.msra.mxu0 0.0
  %129 = vmatpush.msra.mxu0 0.0
  %130 = vmatpush.msra.mxu0 0.0
  %131 = vmatpush.msra.mxu0 0.0
  %132 = vmatpush.msra.mxu0 0.0
  %133 = vmatpush.msra.mxu0 %v116
  %134 = vmatmul.f32.gmra.mxu0 %v113
  %v135 = vpop.f32.mrf.mxu0
  %v136 = vadd.f32 %v110, %v135
  %137 = vdwg.mxu0
  %v138 = vld [vmem:[%s3] sm:$0xff]
  %v140 = vsel %vm84, %v138, 0
  %v143 = vsel %vm88, %v81, 0
  %145 = vmatpush.msra.mxu0 0.0
  %146 = vmatpush.msra.mxu0 0.0
  %147 = vmatpush.msra.mxu0 0.0
  %148 = vmatpush.msra.mxu0 0.0
  %149 = vmatpush.msra.mxu0 0.0
  %150 = vmatpush.msra.mxu0 0.0
  %151 = vmatpush.msra.mxu0 0.0
  %152 = vmatpush.msra.mxu0 0.0
  %153 = vmatpush.msra.mxu0 0.0
  %154 = vmatpush.msra.mxu0 0.0
  %155 = vmatpush.msra.mxu0 0.0
  %156 = vmatpush.msra.mxu0 0.0
  %157 = vmatpush.msra.mxu0 0.0
  %158 = vmatpush.msra.mxu0 0.0
  %159 = vmatpush.msra.mxu0 0.0
  %160 = vmatpush.msra.mxu0 %v143
  %161 = vmatmul.f32.gmra.mxu0 %v140
  %v162 = vpop.f32.mrf.mxu0
  %v163 = vadd.f32 0.0, %v162
  %164 = vdwg.mxu0
  %v165 = vadd.f32 %v136, %v163
  %v166 = vld [vmem:[%s4] sm:$0xff]
  %vm167 = vcmask 261120
  %v168 = vsel %vm167, %v165, 0.0
  %169 = vadd.xlane.f32.xlu0 %v168
  %v170 = vpop.xlane.xlu0 %169
  %v171 = vadd.f32 %v166, %v170
  %vm172 = vcmask 7168
  %173 = vst.msk [vmem:[%s4] sm:$0xff] %vm172, %v171
  %v174 = vld [vmem:[%s5] sm:$0xff]
  %v175 = vmul.f32 %v165, %v165
  %v176 = vsel %vm167, %v175, 0.0
  %177 = vadd.xlane.f32.xlu0 %v176
  %v178 = vpop.xlane.xlu0 %177
  %v179 = vadd.f32 %v174, %v178
  %180 = vst.msk [vmem:[%s5] sm:$0xff] %vm172, %v179
  // Predicated region
  $region22: #{tpu_custom_call.1} parent=0 // pred_check
    _
  $region23: #{tpu_custom_call.1} parent=0 // pred_check_branch
    %182 = sbr.rel (0) target = $region25
  $region24: #{tpu_custom_call.1} parent=0 // pred_region
    _
  $region25: #{tpu_custom_call.1} parent=0 // pred_fallthru
    _
  // Predicated region
  $region26: #{tpu_custom_call.1} parent=0 // pred_check
    _
  $region27: #{tpu_custom_call.1} parent=0 // pred_check_branch
    %184 = sbr.rel (0) target = $region29
  $region28: #{tpu_custom_call.1} parent=0 // pred_region
    _
  $region29: #{tpu_custom_call.1} parent=0 // pred_fallthru
    _
  // Predicated region
  $region30: #{tpu_custom_call.1} parent=0 // pred_check
    _
  $region31: #{tpu_custom_call.1} parent=0 // pred_check_branch
    %186 = sbr.rel (0) target = $region33
  $region32: #{tpu_custom_call.1} parent=0 // pred_region
    _
  $region33: #{tpu_custom_call.1} parent=0 // pred_fallthru
    _
  // Predicated region
  $region34: #{tpu_custom_call.1} parent=0 // pred_check
    _
  $region35: #{tpu_custom_call.1} parent=0 // pred_check_branch
    %188 = sbr.rel (0) target = $region37
  $region36: #{tpu_custom_call.1} parent=0 // pred_region
    _
  $region37: #{tpu_custom_call.1} parent=0 // pred_fallthru
    _

</llo_original>
